<compile_context>
chip_gen: v7x
topology: tpu7x:2x2x1
jax: 0.10.0
libtpu: 0.0.40
codegen_flags: <defaults>
</compile_context>

<pallas_src>
import functools

import jax
import jax.numpy as jnp
from jax.experimental import pallas as pl
from jax.experimental.pallas import tpu as pltpu


def _tv_block_kernel(x_ref, wmask_ref, oh_ref, ow_ref, *, h, w):
    """One grid step: P planes, flattened to (P, H*W) on the lane axis."""
    hw = h * w
    x = x_ref[0].astype(jnp.float32)  # (P, H*W), lane-dense

    if h > 1:
        # Forward diff along H: rows r and r+1 of a plane are exactly W apart in
        # the flattened layout, and no valid pair crosses a plane boundary.
        dh = x[:, w:] - x[:, : hw - w]
        h_part = jnp.sum(dh * dh)
    else:
        h_part = jnp.float32(0.0)

    if w > 1:
        # Forward diff along W: adjacent lanes; pairs that straddle an image-row
        # boundary (col == w-1) are zeroed by the precomputed mask.
        dw = (x[:, 1:] - x[:, : hw - 1]) * wmask_ref[:, : hw - 1]
        w_part = jnp.sum(dw * dw)
    else:
        w_part = jnp.float32(0.0)

    # Lane-dense, unmasked full-tile stores of the per-block partial sums.
    oh_ref[...] = jnp.full(oh_ref.shape, h_part, dtype=jnp.float32)
    ow_ref[...] = jnp.full(ow_ref.shape, w_part, dtype=jnp.float32)


def _pick_planes_per_block(nc, plane_bytes,
                           max_block_bytes=2 * 1024 * 1024,
                           min_block_bytes=512 * 1024):
    """Pick how many (H,W) planes each grid step processes.

    Prefers (a) blocks whose sublane dim is a multiple of 8 (or the whole array),
    (b) leaving >= 2 blocks so a parallel grid can use both v7x cores once blocks
    are already large, (c) the largest block that fits the byte budget.
    """
    divisors = [d for d in range(1, nc + 1) if nc % d == 0]
    fitting = [d for d in divisors if d * plane_bytes <= max_block_bytes] or [1]

    def rank(d):
        sublane_dense = (d % 8 == 0) or (d == nc)
        leaves_parallel_work = (nc // d >= 2) or (d * plane_bytes < min_block_bytes)
        return (sublane_dense, leaves_parallel_work, d)

    return max(fitting, key=rank)


def tv_loss(x, tv_loss_weight=1.0):
    """TVLoss forward. x: (N, C, H, W). Returns scalar float32."""
    n, c, h, w = x.shape
    nc = n * c
    hw = h * w
    # Note: h == 1 / w == 1 -> division by zero (inf/nan), identical hazard to
    # the PyTorch reference; we intentionally preserve that behaviour.
    count_h = float(c * (h - 1) * w)
    count_w = float(c * h * (w - 1))

    itemsize = jnp.dtype(x.dtype).itemsize
    plane_bytes = hw * itemsize
    p = _pick_planes_per_block(nc, plane_bytes)
    num_blocks = nc // p
    block_bytes = p * plane_bytes

    # Free (contiguous) reshape: P planes per block, pixels on the lane axis.
    x3 = x.reshape(num_blocks, p, hw)

    # Zero out W-diff pairs that straddle an image-row boundary (col == w-1).
    # Precomputed here (tiny) to avoid in-kernel integer div/mod on vectors.
    wmask = (
        (jnp.arange(hw, dtype=jnp.int32) % w) != (w - 1)
    ).astype(jnp.float32).reshape(1, hw)

    kernel = functools.partial(_tv_block_kernel, h=h, w=w)

    out_struct = jax.ShapeDtypeStruct((num_blocks, 8, 128), jnp.float32)
    out_block = pl.BlockSpec((1, 8, 128), lambda i: (i, 0, 0))

    oh, ow = pl.pallas_call(
        kernel,
        out_shape=(out_struct, out_struct),
        grid_spec=pltpu.PrefetchScalarGridSpec(
            num_scalar_prefetch=0,
            grid=(num_blocks,),
            in_specs=[
                pl.BlockSpec((1, p, hw), lambda i: (i, 0, 0)),
                pl.BlockSpec((1, hw), lambda i: (0, 0)),
            ],
            out_specs=(out_block, out_block),
        ),
        compiler_params=pltpu.CompilerParams(
            # Blocks are fully independent -> safe to shard across cores (v7x).
            dimension_semantics=("parallel",),
            # Above v5e's 16 MiB scoped default, safe on v6e/v7x; adaptive for
            # the single-huge-plane fallback.
            vmem_limit_bytes=int(min(64 << 20, max(32 << 20, 3 * block_bytes))),
        ),
        cost_estimate=pl.CostEstimate(
            flops=6 * nc * hw,
            transcendentals=0,
            bytes_accessed=nc * hw * itemsize + hw * 4
            + 2 * num_blocks * 8 * 128 * 4,
        ),
    )(x3, wmask)

    # Tiny final reduction + scaling in plain JAX (num_blocks elements each).
    h_tv = jnp.sum(oh[:, 0, 0])
    w_tv = jnp.sum(ow[:, 0, 0])
    return tv_loss_weight * 2.0 * (h_tv / count_h + w_tv / count_w) / n


def _tv_loss_ref(x, tv_loss_weight=1.0):
    x = x.astype(jnp.float32)
    n, c, h, w = x.shape
    count_h = c * (h - 1) * w
    count_w = c * h * (w - 1)
    h_tv = jnp.sum((x[:, :, 1:, :] - x[:, :, : h - 1, :]) ** 2)
    w_tv = jnp.sum((x[:, :, :, 1:] - x[:, :, :, : w - 1]) ** 2)
    return tv_loss_weight * 2.0 * (h_tv / count_h + w_tv / count_w) / n


if __name__ == "__main__":
    key = jax.random.PRNGKey(0)
    x = jax.random.normal(key, (2, 4, 16, 16), dtype=jnp.float32)

    out = jax.block_until_ready(tv_loss(x, tv_loss_weight=1.0))
    ref = jax.block_until_ready(_tv_loss_ref(x, tv_loss_weight=1.0))

    assert jnp.allclose(out, ref, rtol=1e-5, atol=1e-5), (out, ref)
    print("KERNEL_OK")
</pallas_src>

<mosaic_0001>
module attributes {stable_mosaic.version = 11 : i64} {
  func.func @_tv_block_kernel(%arg0: i32, %arg1: memref<1x8x256xf32, #tpu.memory_space<vmem>>, %arg2: memref<1x256xf32, #tpu.memory_space<vmem>>, %arg3: memref<1x8x128xf32, #tpu.memory_space<vmem>>, %arg4: memref<1x8x128xf32, #tpu.memory_space<vmem>>) attributes {dimension_semantics = [#tpu.dimension_semantics<parallel>], iteration_bounds = array<i64: 1>, scalar_prefetch = 0 : i64, scratch_operands = 0 : i64, tpu.core_type = #tpu.core_type<tc>, window_params = [{transform_indices = @transform_0, window_bounds = array<i64: 1, 8, 256>}, {pipeline_mode = #tpu.pipeline_mode<synchronous>, transform_indices = @transform_1, window_bounds = array<i64: 1, 256>}, {transform_indices = @transform_2, window_bounds = array<i64: 1, 8, 128>}, {transform_indices = @transform_3, window_bounds = array<i64: 1, 8, 128>}]} {
    %c0 = arith.constant 0 : index
    %c0_0 = arith.constant 0 : index
    %c0_1 = arith.constant 0 : index
    %0 = vector.load %arg1[%c0, %c0_0, %c0_1] : memref<1x8x256xf32, #tpu.memory_space<vmem>>, vector<1x8x256xf32>
    %1 = vector.shape_cast %0 : vector<1x8x256xf32> to vector<8x256xf32>
    %2 = vector.extract_strided_slice %1 {offsets = [0, 16], sizes = [8, 240], strides = [1, 1]} : vector<8x256xf32> to vector<8x240xf32>
    %3 = vector.extract_strided_slice %1 {offsets = [0, 0], sizes = [8, 240], strides = [1, 1]} : vector<8x256xf32> to vector<8x240xf32>
    %4 = arith.subf %2, %3 : vector<8x240xf32>
    %5 = arith.mulf %4, %4 : vector<8x240xf32>
    %6 = vector.shape_cast %5 : vector<8x240xf32> to vector<1x8x240xf32>
    %cst = arith.constant dense<0.000000e+00> : vector<1xf32>
    %7 = vector.multi_reduction <add>, %6, %cst [1, 2] : vector<1x8x240xf32> to vector<1xf32>
    %8 = vector.shape_cast %7 : vector<1xf32> to vector<1x1x1xf32>
    %9 = vector.extract %8[0, 0, 0] : f32 from vector<1x1x1xf32>
    %10 = vector.extract_strided_slice %1 {offsets = [0, 1], sizes = [8, 255], strides = [1, 1]} : vector<8x256xf32> to vector<8x255xf32>
    %11 = vector.extract_strided_slice %1 {offsets = [0, 0], sizes = [8, 255], strides = [1, 1]} : vector<8x256xf32> to vector<8x255xf32>
    %12 = arith.subf %10, %11 : vector<8x255xf32>
    %c0_2 = arith.constant 0 : index
    %c0_3 = arith.constant 0 : index
    %13 = vector.load %arg2[%c0_2, %c0_3] : memref<1x256xf32, #tpu.memory_space<vmem>>, vector<1x255xf32>
    %14 = vector.broadcast %13 : vector<1x255xf32> to vector<8x255xf32>
    %15 = arith.mulf %12, %14 : vector<8x255xf32>
    %16 = arith.mulf %15, %15 : vector<8x255xf32>
    %17 = vector.shape_cast %16 : vector<8x255xf32> to vector<1x8x255xf32>
    %cst_4 = arith.constant dense<0.000000e+00> : vector<1xf32>
    %18 = vector.multi_reduction <add>, %17, %cst_4 [1, 2] : vector<1x8x255xf32> to vector<1xf32>
    %19 = vector.shape_cast %18 : vector<1xf32> to vector<1x1x1xf32>
    %20 = vector.extract %19[0, 0, 0] : f32 from vector<1x1x1xf32>
    %21 = vector.broadcast %9 : f32 to vector<1x8x128xf32>
    %c0_5 = arith.constant 0 : index
    %c0_6 = arith.constant 0 : index
    %c0_7 = arith.constant 0 : index
    %22 = vector.load %arg3[%c0_5, %c0_6, %c0_7] : memref<1x8x128xf32, #tpu.memory_space<vmem>>, vector<1x8x128xf32>
    tpu.vector_store %arg3[%c0_5, %c0_6, %c0_7], %21 {strides = array<i32>} : memref<1x8x128xf32, #tpu.memory_space<vmem>>, vector<1x8x128xf32>,
    %23 = vector.broadcast %20 : f32 to vector<1x8x128xf32>
    %c0_8 = arith.constant 0 : index
    %c0_9 = arith.constant 0 : index
    %c0_10 = arith.constant 0 : index
    %24 = vector.load %arg4[%c0_8, %c0_9, %c0_10] : memref<1x8x128xf32, #tpu.memory_space<vmem>>, vector<1x8x128xf32>
    tpu.vector_store %arg4[%c0_8, %c0_9, %c0_10], %23 {strides = array<i32>} : memref<1x8x128xf32, #tpu.memory_space<vmem>>, vector<1x8x128xf32>,
    return
  }
  func.func @transform_0(%arg0: i32) -> (i32, i32, i32) {
    %c0_i32 = arith.constant 0 : i32
    %c0_i32_0 = arith.constant 0 : i32
    %c0_i32_1 = arith.constant 0 : i32
    return %arg0, %c0_i32, %c0_i32_0 : i32, i32, i32
  }
  func.func @transform_1(%arg0: i32) -> (i32, i32) {
    %c0_i32 = arith.constant 0 : i32
    %c0_i32_0 = arith.constant 0 : i32
    %c0_i32_1 = arith.constant 0 : i32
    return %c0_i32, %c0_i32_0 : i32, i32
  }
  func.func @transform_2(%arg0: i32) -> (i32, i32, i32) {
    %c0_i32 = arith.constant 0 : i32
    %c0_i32_0 = arith.constant 0 : i32
    %c0_i32_1 = arith.constant 0 : i32
    return %arg0, %c0_i32, %c0_i32_0 : i32, i32, i32
  }
  func.func @transform_3(%arg0: i32) -> (i32, i32, i32) {
    %c0_i32 = arith.constant 0 : i32
    %c0_i32_0 = arith.constant 0 : i32
    %c0_i32_1 = arith.constant 0 : i32
    return %arg0, %c0_i32, %c0_i32_0 : i32, i32, i32
  }
}

</mosaic_0001>

<llo_original>
// kernel: tpu_custom_call.1
$region0: #{tpu_custom_call.1}
  #allocation0 [shape = 'u32[]', space=smem, size = 0x4, offset = 0x4, fixed_abs, tag = 'smem constant byte address 0x4 - core index']
  #allocation1 [shape = 'u32[144,128]{1,0:T(1,128)}', space=vmem, size = 0x12000, scoped, tag = 'internal scratch']
  %s0 = inlined_call_operand.hbm [shape: f32[1,8,256], index: 0, kind: input, shape index: {}]
  %s1 = inlined_call_operand.vmem [shape: f32[1,256], index: 1, kind: input, shape index: {}]
  %s2 = inlined_call_operand.hbm [shape: f32[1,8,128], index: 2, kind: output, shape index: {0}]
  %s3 = inlined_call_operand.hbm [shape: f32[1,8,128], index: 3, kind: output, shape index: {1}]
  %4 = xla_tuple %s2, %s3
  %s5 = sld [smem:[#allocation0]]
  $region30: #{tpu_custom_call.1} parent=0
    _
  %s7 = ssub.s32 1, %s5
  %s8 = scalar_select 0, %s7, %s5
  $region1: #{tpu_custom_call.1} parent=0
    #allocation2 [shape = 'u8[8192]{0}', space=vmem, size = 0x2000, scoped, tag = 'input window, operand 0, single buffered']
    #allocation3 [shape = 's32[1]{0}', space=sflag, size = 0x4, scoped, tag = 'scoped memory for tpu_custom_call.1']
    #allocation4 [shape = 's32[1]{0}', space=sflag, size = 0x4, scoped, tag = 'scoped memory for tpu_custom_call.1']
    #allocation5 [shape = 'u8[4096]{0}', space=vmem, size = 0x1000, scoped, tag = 'output window, operand 0, single buffered']
    #allocation6 [shape = 'u8[4096]{0}', space=vmem, size = 0x1000, scoped, tag = 'output window, operand 1, single buffered']
    #allocation7 [shape = 's32[1]{0}', space=sflag, size = 0x4, scoped, tag = 'scoped memory for tpu_custom_call.1']
    %9 = vsyncpa [#allocation3], 0
    %10 = vsyncpa [#allocation4], 0
    %11 = vsyncpa [#allocation7], 0
    // Predicated region
    $region2: #{tpu_custom_call.1} parent=1 // pred_check
      _
    $region3: #{tpu_custom_call.1} parent=1 // pred_check_branch
      %13 = sbr.rel (0) target = $region5
    $region4: #{tpu_custom_call.1} parent=1 // pred_region
      %s15 = ssub.s32 256, 256
      %16 = vsyncadd [#allocation3], %s15
      %s18 = sshll.u32 [#allocation2], 4
      %s19 = int_to_ptr.vmem [resolvable:$true] %s18
      %21 = dma.hbm_to_vmem [thread:$0]  %s0, 256, %s19, [#allocation3]
    $region5: #{tpu_custom_call.1} parent=1 // pred_fallthru
      _
    // Predicated region
    $region6: #{tpu_custom_call.1} parent=1 // pred_check
      _
    $region7: #{tpu_custom_call.1} parent=1 // pred_check_branch
      %23 = sbr.rel (0) target = $region9
    $region8: #{tpu_custom_call.1} parent=1 // pred_region
      _
    $region9: #{tpu_custom_call.1} parent=1 // pred_fallthru
      _
    // Predicated region
    $region10: #{tpu_custom_call.1} parent=1 // pred_check
      _
    $region11: #{tpu_custom_call.1} parent=1 // pred_check_branch
      %25 = sbr.rel (0) target = $region13
    $region12: #{tpu_custom_call.1} parent=1 // pred_region
      %26 = dma.done [#allocation3], 256
    $region13: #{tpu_custom_call.1} parent=1 // pred_fallthru
      _
    %v27 = vld [vmem:[#allocation2] sm:$0xff]
    %v28 = vld [vmem:[#allocation2 + $0x8] sm:$0xff]
    %31 = vrot.lane.b32.xlu0 %v27, 16
    %v32 = vpop.permute.xlu0 %31
    %33 = vrot.lane.b32.xlu0 %v28, 16
    %v34 = vpop.permute.xlu0 %33
    %vm35 = vcmask 130048
    %v36 = vsel %vm35, %v32, %v34
    %v39 = vsub.f32 %v27, %v32
    %v40 = vsub.f32 %v28, %v36
    %v41 = vmul.f32 %v39, %v39
    %v42 = vmul.f32 %v40, %v40
    %45 = vrot.lane.b32.xlu0 %v41, 112
    %v46 = vpop.permute.xlu0 %45
    %47 = vrot.lane.b32.xlu0 %v42, 112
    %v48 = vpop.permute.xlu0 %47
    %vm49 = vcmask 916480
    %v50 = vsel %vm49, %v46, %v48
    %v53 = vsel %vm49, %v48, 0.0
    %v54 = vadd.f32 %v50, %v53
    %55 = vadd.xlane.f32.xlu0 %v54
    %v56 = vpop.xlane.xlu0 %55
    %v57 = vrot.slane %v56, 4
    %v58 = vadd.f32 %v56, %v57
    %v59 = vrot.slane %v58, 2
    %v60 = vadd.f32 %v58, %v59
    %v61 = vrot.slane %v60, 1
    %v62 = vadd.f32 %v60, %v61
    %s63 = vtos %v62
    %64 = vrot.lane.b32.xlu0 %v27, 1
    %v65 = vpop.permute.xlu0 %64
    %66 = vrot.lane.b32.xlu0 %v28, 1
    %v67 = vpop.permute.xlu0 %66
    %vm68 = vcmask 7168
    %v69 = vsel %vm68, %v65, %v67
    %v72 = vsub.f32 %v27, %v65
    %v73 = vsub.f32 %v28, %v69
    %v74 = vld [vmem:[%s1] sm:$0x3]
    %v76 = vlaneseq
    %v77 = vshrl.u32 %v76, 7
    %v78 = vsub.s32 0, %v77
    %v79 = vrot.slane %v74, %v78
    %v80 = vlaneseq
    %v81 = vshrl.u32 %v80, 7
    %v82 = vsub.s32 1, %v81
    %v83 = vrot.slane %v74, %v82
    %84 = vrot.lane.b32.xlu0 %v79, 1
    %v85 = vpop.permute.xlu0 %84
    %86 = vrot.lane.b32.xlu0 %v83, 1
    %v87 = vpop.permute.xlu0 %86
    %v88 = vsel %vm68, %v85, %v87
    %v91 = vmul.f32 %v72, %v85
    %v92 = vmul.f32 %v73, %v88
    %v93 = vmul.f32 %v91, %v91
    %v94 = vmul.f32 %v92, %v92
    %97 = vrot.lane.b32.xlu0 %v93, 127
    %v98 = vpop.permute.xlu0 %97
    %99 = vrot.lane.b32.xlu0 %v94, 127
    %v100 = vpop.permute.xlu0 %99
    %vm101 = vcmask 1039360
    %v102 = vsel %vm101, %v98, %v100
    %v105 = vsel %vm101, %v100, 0.0
    %v106 = vadd.f32 %v102, %v105
    %107 = vadd.xlane.f32.xlu0 %v106
    %v108 = vpop.xlane.xlu0 %107
    %v109 = vrot.slane %v108, 4
    %v110 = vadd.f32 %v108, %v109
    %v111 = vrot.slane %v110, 2
    %v112 = vadd.f32 %v110, %v111
    %v113 = vrot.slane %v112, 1
    %v114 = vadd.f32 %v112, %v113
    %s115 = vtos %v114
    %v116 = vstv %s63
    %117 = vst [vmem:[#allocation5] sm:$0xff] %v116
    %v118 = vstv %s115
    %119 = vst [vmem:[#allocation6] sm:$0xff] %v118
    // Predicated region
    $region14: #{tpu_custom_call.1} parent=1 // pred_check
      _
    $region15: #{tpu_custom_call.1} parent=1 // pred_check_branch
      %121 = sbr.rel (0) target = $region17
    $region16: #{tpu_custom_call.1} parent=1 // pred_region
      %s123 = ssub.s32 128, 128
      %124 = vsyncadd [#allocation4], %s123
      %s126 = sshll.u32 [#allocation5], 4
      %s127 = int_to_ptr.vmem [resolvable:$true] %s126
      %129 = dma.vmem_to_hbm [thread:$0]  %s127, 128, %s2, [#allocation4]
    $region17: #{tpu_custom_call.1} parent=1 // pred_fallthru
      _
    // Predicated region
    $region18: #{tpu_custom_call.1} parent=1 // pred_check
      _
    $region19: #{tpu_custom_call.1} parent=1 // pred_check_branch
      %131 = sbr.rel (0) target = $region21
    $region20: #{tpu_custom_call.1} parent=1 // pred_region
      %s133 = ssub.s32 128, 128
      %134 = vsyncadd [#allocation7], %s133
      %s136 = sshll.u32 [#allocation6], 4
      %s137 = int_to_ptr.vmem [resolvable:$true] %s136
      %139 = dma.vmem_to_hbm [thread:$0]  %s137, 128, %s3, [#allocation7]
    $region21: #{tpu_custom_call.1} parent=1 // pred_fallthru
      _
    // Predicated region
    $region22: #{tpu_custom_call.1} parent=1 // pred_check
      _
    $region23: #{tpu_custom_call.1} parent=1 // pred_check_branch
      %141 = sbr.rel (0) target = $region25
    $region24: #{tpu_custom_call.1} parent=1 // pred_region
      %142 = dma.done [#allocation4], 128
    $region25: #{tpu_custom_call.1} parent=1 // pred_fallthru
      _
    // Predicated region
    $region26: #{tpu_custom_call.1} parent=1 // pred_check
      _
    $region27: #{tpu_custom_call.1} parent=1 // pred_check_branch
      %144 = sbr.rel (0) target = $region29
    $region28: #{tpu_custom_call.1} parent=1 // pred_region
      %145 = dma.done [#allocation7], 128
    $region29: #{tpu_custom_call.1} parent=1 // pred_fallthru
      _
    %146 = vsyncpa [#allocation3], 1
    %147 = vsyncpa [#allocation4], 1
    %148 = vsyncpa [#allocation7], 1

</llo_original>
